<compile_context>
chip_gen: v7x
topology: tpu7x:2x2x1
jax: 0.10.0
libtpu: 0.0.40
codegen_flags: <defaults>
</compile_context>

<pallas_src>
import numpy as np
import jax
import jax.numpy as jnp
from jax.experimental import pallas as pl
from jax.experimental.pallas import tpu as pltpu


def _pos_embed_kernel(pos_ref, table_ref, out_ref):
    # pos_ref:   (1, S, 1) int32   positions for this batch element
    # table_ref: (L, D)    float32 full positional-encoding table (VMEM resident)
    # out_ref:   (1, S, D) float32
    pos_col = pos_ref[0]                                   # (S, 1) int32
    L, _ = table_ref.shape
    S = pos_col.shape[0]
    # One-hot selection matrix built on the VPU: sel[s, l] = (pos[s] == l).
    sel = (pos_col == jax.lax.broadcasted_iota(jnp.int32, (S, L), 1)).astype(jnp.float32)
    # Embedding lookup as a single MXU matmul (exact: one 1.0 per row of `sel`),
    # written as one lane-dense (S, D) block.
    out_ref[0] = jnp.dot(sel, table_ref[...], preferred_element_type=jnp.float32)


def _pallas_pos_lookup(input_pos, pos_table):
    """input_pos: (B, S) int32, pos_table: (L, D) float32 -> (B, S, D) float32."""
    B, S = input_pos.shape
    L, D = pos_table.shape
    # Reshape to (B, S, 1) so each block dim equals the full array dim
    # (satisfies the (8,128) block constraint with zero padding).
    pos3 = input_pos.reshape(B, S, 1)
    return pl.pallas_call(
        _pos_embed_kernel,
        out_shape=jax.ShapeDtypeStruct((B, S, D), jnp.float32),
        grid=(B,),
        in_specs=[
            pl.BlockSpec((1, S, 1), lambda b: (b, 0, 0)),
            pl.BlockSpec((L, D), lambda b: (0, 0)),        # constant -> VMEM resident
        ],
        out_specs=pl.BlockSpec((1, S, D), lambda b: (b, 0, 0)),
        compiler_params=pltpu.CompilerParams(
            dimension_semantics=("parallel",)),            # v7x dual-TC sharding
    )(pos3, pos_table)


class PosEncoding:
    """JAX/Pallas port of Model/MTFSNet.py::PosEncoding (inference)."""

    def __init__(self, max_seq_len, d_model=512):
        # Identical sinusoidal table construction to the PyTorch __init__.
        pe = np.array([[pos / np.power(10000, 2.0 * (j // 2) / d_model)
                        for j in range(d_model)] for pos in range(max_seq_len)])
        pe[:, 0::2] = np.sin(pe[:, 0::2])
        pe[:, 1::2] = np.cos(pe[:, 1::2])
        self.pos_table = jnp.asarray(pe.astype(np.float32))           # (L, D)

    def __call__(self, input_len):
        # Host-side index construction, exactly mirroring
        #   torch.tensor([list(range(0, len)) for len in input_len])
        # (torch.tensor requires a rectangular list, i.e. all lengths equal).
        # TODO(synk): this list->tensor step is host control flow (like the PyTorch
        # reference); only the embedding lookup itself runs in the Pallas kernel.
        lens = [int(l) for l in np.asarray(input_len).reshape(-1)]
        assert len(lens) > 0 and all(l == lens[0] for l in lens), \
            "PosEncoding.forward requires equal sequence lengths (rectangular tensor)"
        input_pos = np.asarray([list(range(0, l)) for l in lens], dtype=np.int32)
        return _pallas_pos_lookup(jnp.asarray(input_pos), self.pos_table)


if __name__ == "__main__":
    # Small shapes consistent with the module: d_model=128 (lane-dense),
    # max_seq_len=8, batch=4; all sequence lengths equal (docstring: [7,7,...,7]).
    MAX_SEQ_LEN, D_MODEL, BATCH = 8, 128, 4

    # Deterministic example input from PRNGKey(0): one shared length in
    # [1, MAX_SEQ_LEN], broadcast over the batch (lengths must all be equal).
    key = jax.random.PRNGKey(0)
    seq_len = int(jax.random.randint(key, (), 1, MAX_SEQ_LEN + 1))
    input_len = [seq_len] * BATCH

    model = PosEncoding(MAX_SEQ_LEN, D_MODEL)
    out = jax.block_until_ready(model(input_len))

    # Pure-JAX reference: plain embedding lookup of rows 0..seq_len-1.
    ref_rows = jnp.take(model.pos_table, jnp.arange(seq_len), axis=0)      # (S, D)
    ref = jnp.broadcast_to(ref_rows[None], (BATCH, seq_len, D_MODEL))      # (B, S, D)

    assert out.shape == (BATCH, seq_len, D_MODEL), out.shape
    assert bool(jnp.all(jnp.isfinite(out)))
    np.testing.assert_allclose(np.asarray(out), np.asarray(ref), rtol=1e-6, atol=1e-6)
    print("KERNEL_OK")
</pallas_src>

<mosaic_0001>
module attributes {stable_mosaic.version = 11 : i64} {
  func.func @_pos_embed_kernel(%arg0: i32, %arg1: memref<1x6x1xi32, #tpu.memory_space<vmem>>, %arg2: memref<8x128xf32, #tpu.memory_space<vmem>>, %arg3: memref<1x6x128xf32, #tpu.memory_space<vmem>>) attributes {dimension_semantics = [#tpu.dimension_semantics<parallel>], iteration_bounds = array<i64: 4>, scalar_prefetch = 0 : i64, scratch_operands = 0 : i64, tpu.core_type = #tpu.core_type<tc>, window_params = [{transform_indices = @transform_0, window_bounds = array<i64: 1, 6, 1>}, {pipeline_mode = #tpu.pipeline_mode<synchronous>, transform_indices = @transform_1, window_bounds = array<i64: 8, 128>}, {transform_indices = @transform_2, window_bounds = array<i64: 1, 6, 128>}]} {
    %c0 = arith.constant 0 : index
    %c0_0 = arith.constant 0 : index
    %c0_1 = arith.constant 0 : index
    %0 = vector.load %arg1[%c0, %c0_0, %c0_1] : memref<1x6x1xi32, #tpu.memory_space<vmem>>, vector<1x6x1xi32>
    %1 = vector.shape_cast %0 : vector<1x6x1xi32> to vector<6x1xi32>
    %2 = tpu.iota {dimensions = array<i32: 1>} : vector<6x8xi32>
    %3 = vector.broadcast %1 : vector<6x1xi32> to vector<6x8xi32>
    %4 = arith.cmpi eq, %3, %2 : vector<6x8xi32>
    %5 = arith.extui %4 : vector<6x8xi1> to vector<6x8xi32>
    %6 = arith.sitofp %5 : vector<6x8xi32> to vector<6x8xf32>
    %c0_2 = arith.constant 0 : index
    %c0_3 = arith.constant 0 : index
    %7 = vector.load %arg2[%c0_2, %c0_3] : memref<8x128xf32, #tpu.memory_space<vmem>>, vector<8x128xf32>
    %cst = arith.constant dense<0.000000e+00> : vector<6x128xf32>
    %8 = tpu.matmul %6, %7, %cst {dimension_numbers = #tpu.dot_dimension_numbers<[1], [0], [0], [1], [0, 0, 1, 1], [], []>} : vector<6x8xf32>, vector<8x128xf32>, vector<6x128xf32> -> vector<6x128xf32>
    %c0_4 = arith.constant 0 : index
    %c0_5 = arith.constant 0 : index
    %c0_6 = arith.constant 0 : index
    %9 = vector.load %arg3[%c0_4, %c0_5, %c0_6] : memref<1x6x128xf32, #tpu.memory_space<vmem>>, vector<1x6x128xf32>
    %10 = vector.shape_cast %9 : vector<1x6x128xf32> to vector<6x128xf32>
    %11 = vector.shape_cast %8 : vector<6x128xf32> to vector<1x6x128xf32>
    tpu.vector_store %arg3[%c0_4, %c0_5, %c0_6], %11 {strides = array<i32>} : memref<1x6x128xf32, #tpu.memory_space<vmem>>, vector<1x6x128xf32>,
    return
  }
  func.func @transform_0(%arg0: i32) -> (i32, i32, i32) {
    %c0_i32 = arith.constant 0 : i32
    %c0_i32_0 = arith.constant 0 : i32
    %c0_i32_1 = arith.constant 0 : i32
    return %arg0, %c0_i32, %c0_i32_0 : i32, i32, i32
  }
  func.func @transform_1(%arg0: i32) -> (i32, i32) {
    %c0_i32 = arith.constant 0 : i32
    %c0_i32_0 = arith.constant 0 : i32
    %c0_i32_1 = arith.constant 0 : i32
    return %c0_i32, %c0_i32_0 : i32, i32
  }
  func.func @transform_2(%arg0: i32) -> (i32, i32, i32) {
    %c0_i32 = arith.constant 0 : i32
    %c0_i32_0 = arith.constant 0 : i32
    %c0_i32_1 = arith.constant 0 : i32
    return %arg0, %c0_i32, %c0_i32_0 : i32, i32, i32
  }
}

</mosaic_0001>

<llo_original>
// kernel: tpu_custom_call.1
$region0: #{tpu_custom_call.1}
  #allocation0 [shape = 'u32[]', space=smem, size = 0x4, offset = 0x4, fixed_abs, tag = 'smem constant byte address 0x4 - core index']
  #allocation1 [shape = 'u32[144,128]{1,0:T(1,128)}', space=vmem, size = 0x12000, scoped, tag = 'internal scratch']
  %s0 = inlined_call_operand.vmem [shape: s32[4,6,1], index: 0, kind: input, shape index: {}]
  %s1 = inlined_call_operand.vmem [shape: f32[8,128], index: 1, kind: input, shape index: {}]
  %s2 = inlined_call_operand.vmem [shape: f32[4,6,128], index: 2, kind: output, shape index: {}]
  %s3 = sld [smem:[#allocation0]]
  $region41: #{tpu_custom_call.1} parent=0
    _
  %s5 = ssub.s32 1, %s3
  %s6 = scalar_select 0, %s5, %s3
  loop: start=0, step=1, limit=6
  $region2: #{tpu_custom_call.1} parent=0 // loop_pre_header
    _
  $region3: #{tpu_custom_call.1} parent=0 // loop_header
    %s8 = sphi 0, %s12
    %p9 = scmp.ge.s32.totalorder %s8, 6
    %s18 = sphi 0, %s20
    %s21 = sphi 0, %s18
    %s22 = sphi 0, %s21
    %s38 = sphi 0, %s22
    %s42 = sphi 0, %s42
    %s44 = sphi 0, %s42
    %s45 = sphi 0, %s44
    %s59 = sphi 0, %s45
    %s65 = sphi 0, %s67
    %s68 = sphi 0, %s65
    %s69 = sphi 0, %s68
    %s85 = sphi 0, %s69
  $region4: #{tpu_custom_call.1} parent=0 // loop_header_branch
    %11 = sbr.rel (%p9) target = $region8
  $region5: #{tpu_custom_call.1} parent=0 // loop_body
    %s13 = ssub.s32 %s8, 1
    %s14 = ssub.s32 %s8, 2
    %s15 = sadd.s32 %s8, 1
    %s16 = ssub.s32 %s8, %s15
    %p17 = scmp.eq.s32.totalorder %s16, 0
    %s19 = sadd.s32 %s18, 1
    %s20 = scalar_select %p17, %s18, %s19
    %p23 = pneg %p17
    %p24 = scmp.eq.s32.totalorder %s8, 3
    %p25 = por %p23, %p24
    %p26 = scmp.ne.s32.totalorder %s18, %s21
    %p27 = scmp.eq.s32.totalorder %s8, 0
    %p28 = por %p26, %p27
    %p29 = scmp.ne.s32.totalorder %s18, %s21
    %p30 = scmp.eq.s32.totalorder %s13, 3
    %p31 = por %p29, %p30
    %p32 = scmp.ne.s32.totalorder %s21, %s22
    %p33 = scmp.eq.s32.totalorder %s13, 0
    %p34 = por %p32, %p33
    %p35 = scmp.ne.s32.totalorder %s21, %s22
    %p36 = scmp.eq.s32.totalorder %s14, 3
    %p37 = por %p35, %p36
    %p39 = scmp.ne.s32.totalorder %s22, %s38
    %p40 = scmp.eq.s32.totalorder %s14, 0
    %p41 = por %p39, %p40
    %s43 = sadd.s32 %s42, 1
    %p46 = scmp.eq.s32.totalorder %s8, 3
    %p47 = scmp.ne.s32.totalorder %s42, %s44
    %p48 = scmp.eq.s32.totalorder %s8, 0
    %p49 = por %p47, %p48
    %p50 = scmp.ne.s32.totalorder %s42, %s44
    %p51 = scmp.eq.s32.totalorder %s13, 3
    %p52 = por %p50, %p51
    %p53 = scmp.ne.s32.totalorder %s44, %s45
    %p54 = scmp.eq.s32.totalorder %s13, 0
    %p55 = por %p53, %p54
    %p56 = scmp.ne.s32.totalorder %s44, %s45
    %p57 = scmp.eq.s32.totalorder %s14, 3
    %p58 = por %p56, %p57
    %p60 = scmp.ne.s32.totalorder %s45, %s59
    %p61 = scmp.eq.s32.totalorder %s14, 0
    %p62 = por %p60, %p61
    %s63 = ssub.s32 %s8, %s15
    %p64 = scmp.eq.s32.totalorder %s63, 0
    %s66 = sadd.s32 %s65, 1
    %s67 = scalar_select %p64, %s65, %s66
    %p70 = pneg %p64
    %p71 = scmp.eq.s32.totalorder %s8, 3
    %p72 = por %p70, %p71
    %p73 = scmp.ne.s32.totalorder %s65, %s68
    %p74 = scmp.eq.s32.totalorder %s8, 0
    %p75 = por %p73, %p74
    %p76 = scmp.ne.s32.totalorder %s65, %s68
    %p77 = scmp.eq.s32.totalorder %s13, 3
    %p78 = por %p76, %p77
    %p79 = scmp.ne.s32.totalorder %s68, %s69
    %p80 = scmp.eq.s32.totalorder %s13, 0
    %p81 = por %p79, %p80
    %p82 = scmp.ne.s32.totalorder %s68, %s69
    %p83 = scmp.eq.s32.totalorder %s14, 3
    %p84 = por %p82, %p83
    %p86 = scmp.ne.s32.totalorder %s69, %s85
    %p87 = scmp.eq.s32.totalorder %s14, 0
    %p88 = por %p86, %p87
    %p89 = scmp.le.s32.totalorder 1, %s8
    %p90 = scmp.lt.s32.totalorder %s8, 5
    %p91 = pnand %p89, %p90
    %p92 = pneg %p91
    // Predicated region
    $region9: #{tpu_custom_call.1} parent=5 // pred_check
      _
    $region10: #{tpu_custom_call.1} parent=5 // pred_check_branch
      %94 = sbr.rel (%p91) target = $region12
    $region11: #{tpu_custom_call.1} parent=5 // pred_region
      %s95 = ssub.s32 %s8, 1
      // Predicated region
      $region13: #{tpu_custom_call.1} parent=11 // pred_check
        %p96 = pneg %p55
      $region14: #{tpu_custom_call.1} parent=11 // pred_check_branch
        %98 = sbr.rel (%p96) target = $region16
      $region15: #{tpu_custom_call.1} parent=11 // pred_region
        _
      $region16: #{tpu_custom_call.1} parent=11 // pred_fallthru
        _
    $region12: #{tpu_custom_call.1} parent=5 // pred_fallthru
      _
    %p99 = scmp.lt.s32.totalorder %s8, 4
    // Predicated region
    $region17: #{tpu_custom_call.1} parent=5 // pred_check
      %p100 = pneg %p99
    $region18: #{tpu_custom_call.1} parent=5 // pred_check_branch
      %102 = sbr.rel (%p100) target = $region20
    $region19: #{tpu_custom_call.1} parent=5 // pred_region
      // Predicated region
      $region21: #{tpu_custom_call.1} parent=19 // pred_check
        %p103 = pneg %p28
      $region22: #{tpu_custom_call.1} parent=19 // pred_check_branch
        %105 = sbr.rel (%p103) target = $region24
      $region23: #{tpu_custom_call.1} parent=19 // pred_region
        %p106 = scmp.lt.s32.totalorder %s8, 3
        %s107 = scalar_select %p106, %s8, 3
        %s108 = smul.addr %s107, 8
        %s109 = scalar_lea.vmem %s0, %s108
      $region24: #{tpu_custom_call.1} parent=19 // pred_fallthru
        _
    $region20: #{tpu_custom_call.1} parent=5 // pred_fallthru
      _
    %p110 = scmp.le.s32.totalorder 1, %s8
    %p111 = scmp.lt.s32.totalorder %s8, 5
    %p112 = pnand %p110, %p111
    %p113 = pneg %p112
    // Predicated region
    $region25: #{tpu_custom_call.1} parent=5 // pred_check
      _
    $region26: #{tpu_custom_call.1} parent=5 // pred_check_branch
      %115 = sbr.rel (%p112) target = $region28
    $region27: #{tpu_custom_call.1} parent=5 // pred_region
      %s116 = ssub.s32 %s8, 1
      %p117 = scmp.lt.s32.totalorder %s13, 3
      %s118 = scalar_select %p117, %s13, 3
      %s119 = smul.addr %s118, 8
      %s120 = scalar_lea.vmem %s0, %s119
      %p121 = pneg %p34
      %p122 = pneg %p31
      %p123 = pneg %p55
      %p124 = pneg %p52
      %p125 = pneg %p81
      %p126 = pneg %p78
      %p127 = scmp.lt.s32.totalorder %s13, 3
      %s128 = scalar_select %p127, %s13, 3
      %s129 = smul.addr %s128, 8
      %s130 = scalar_lea.vmem %s2, %s129
      %p131 = scmp.lt.s32.totalorder %s13, 3
      %s132 = scalar_select %p131, %s13, 3
      %s133 = smul.addr %s132, 8
      %s134 = scalar_lea.vmem %s0, %s133
      %p135 = scmp.lt.s32.totalorder %s13, 3
      %s136 = scalar_select %p135, %s13, 3
      %s137 = smul.addr %s136, 8
      %s138 = scalar_lea.vmem %s2, %s137
      %v139 = vld [vmem:[%s134] sm:$0x3f]
      %v140 = vlaneseq
      %v141 = vand.u32 %v140, 127
      %142 = vset.pattern.permute.xlu0 0
      %143 = vperm.xlu0 %142, %v139
      %v144 = vpop.permute.xlu0 %143
      %vm145 = vcmp.eq.s32.totalorder %v144, %v141
      %v146 = vsel %vm145, 1, 0
      %v147 = vcvt.s32.f32 %v146
      %v148 = vld [vmem:[%s1] sm:$0xff]
      %vm149 = vcmask 64512
      %v151 = vsel %vm149, %v147, 0
      %153 = vmatprep.subr.mxu0 0.0
      %154 = vmatpush1.msra.mxu0 %v148
      %155 = vmatprep.subr.mxu0 0.0
      %156 = vmatpush1.msra.mxu0 0.0
      %157 = vmatprep.subr.mxu0 0.0
      %158 = vmatpush1.msra.mxu0 0.0
      %159 = vmatprep.subr.mxu0 0.0
      %160 = vmatpush1.msra.mxu0 0.0
      %161 = vmatprep.subr.mxu0 0.0
      %162 = vmatpush1.msra.mxu0 0.0
      %163 = vmatprep.subr.mxu0 0.0
      %164 = vmatpush1.msra.mxu0 0.0
      %165 = vmatprep.subr.mxu0 0.0
      %166 = vmatpush1.msra.mxu0 0.0
      %167 = vmatprep.subr.mxu0 0.0
      %168 = vmatpush1.msra.mxu0 0.0
      %169 = vmatprep.subr.mxu0 0.0
      %170 = vmatpush1.msra.mxu0 0.0
      %171 = vmatprep.subr.mxu0 0.0
      %172 = vmatpush1.msra.mxu0 0.0
      %173 = vmatprep.subr.mxu0 0.0
      %174 = vmatpush1.msra.mxu0 0.0
      %175 = vmatprep.subr.mxu0 0.0
      %176 = vmatpush1.msra.mxu0 0.0
      %177 = vmatprep.subr.mxu0 0.0
      %178 = vmatpush1.msra.mxu0 0.0
      %179 = vmatprep.subr.mxu0 0.0
      %180 = vmatpush1.msra.mxu0 0.0
      %181 = vmatprep.subr.mxu0 0.0
      %182 = vmatpush1.msra.mxu0 0.0
      %183 = vmatprep.subr.mxu0 0.0
      %184 = vmatpush1.msra.mxu0 0.0
      %185 = vmatprep.subr.mxu0 0.0
      %186 = vmatpush1.msra.mxu0 0.0
      %187 = vmatprep.subr.mxu0 0.0
      %188 = vmatpush1.msra.mxu0 0.0
      %189 = vmatprep.subr.mxu0 0.0
      %190 = vmatpush1.msra.mxu0 0.0
      %191 = vmatprep.subr.mxu0 0.0
      %192 = vmatpush1.msra.mxu0 0.0
      %193 = vmatprep.subr.mxu0 0.0
      %194 = vmatpush1.msra.mxu0 0.0
      %195 = vmatprep.subr.mxu0 0.0
      %196 = vmatpush1.msra.mxu0 0.0
      %197 = vmatprep.subr.mxu0 0.0
      %198 = vmatpush1.msra.mxu0 0.0
      %199 = vmatprep.subr.mxu0 0.0
      %200 = vmatpush1.msra.mxu0 0.0
      %201 = vmatprep.subr.mxu0 0.0
      %202 = vmatpush1.msra.mxu0 0.0
      %203 = vmatprep.subr.mxu0 0.0
      %204 = vmatpush1.msra.mxu0 0.0
      %205 = vmatprep.subr.mxu0 0.0
      %206 = vmatpush1.msra.mxu0 0.0
      %207 = vmatprep.subr.mxu0 0.0
      %208 = vmatpush1.msra.mxu0 0.0
      %209 = vmatprep.subr.mxu0 0.0
      %210 = vmatpush1.msra.mxu0 0.0
      %211 = vmatprep.subr.mxu0 0.0
      %212 = vmatpush1.msra.mxu0 0.0
      %213 = vmatprep.subr.mxu0 0.0
      %214 = vmatpush1.msra.mxu0 0.0
      %215 = vmatprep.subr.mxu0 0.0
      %216 = vmatpush1.msra.mxu0 0.0
      %217 = vmatprep.mubr.f32.mxu0 0.0
      %218 = vmatmul.mubr.f32.gmra.mrb[0].mxu0 %v151
      %v219 = vpop.f32.mrb[0].mxu0
      %v220 = vadd.f32 0.0, %v219
      %v221 = vpop.f32.mrb[0].mxu0
      %222 = vdwg.mxu0
      %223 = vst [vmem:[%s138] sm:$0x3f] %v220
      %p224 = scmp.lt.s32.totalorder %s13, 3
      %s225 = scalar_select %p224, %s13, 3
      %s226 = smul.addr %s225, 8
      %s227 = scalar_lea.vmem %s2, %s226
      // Predicated region
      $region29: #{tpu_custom_call.1} parent=27 // pred_check
        %p228 = pneg %p78
      $region30: #{tpu_custom_call.1} parent=27 // pred_check_branch
        %230 = sbr.rel (%p228) target = $region32
      $region31: #{tpu_custom_call.1} parent=27 // pred_region
        _
      $region32: #{tpu_custom_call.1} parent=27 // pred_fallthru
        _
    $region28: #{tpu_custom_call.1} parent=5 // pred_fallthru
      _
    %p231 = scmp.le.s32.totalorder 2, %s8
    // Predicated region
    $region33: #{tpu_custom_call.1} parent=5 // pred_check
      %p232 = pneg %p231
    $region34: #{tpu_custom_call.1} parent=5 // pred_check_branch
      %234 = sbr.rel (%p232) target = $region36
    $region35: #{tpu_custom_call.1} parent=5 // pred_region
      %s235 = ssub.s32 %s8, 2
      // Predicated region
      $region37: #{tpu_custom_call.1} parent=35 // pred_check
        %p236 = pneg %p84
      $region38: #{tpu_custom_call.1} parent=35 // pred_check_branch
        %238 = sbr.rel (%p236) target = $region40
      $region39: #{tpu_custom_call.1} parent=35 // pred_region
        %p239 = scmp.lt.s32.totalorder %s14, 3
        %s240 = scalar_select %p239, %s14, 3
        %s241 = smul.addr %s240, 8
        %s242 = scalar_lea.vmem %s2, %s241
      $region40: #{tpu_custom_call.1} parent=35 // pred_fallthru
        _
    $region36: #{tpu_custom_call.1} parent=5 // pred_fallthru
      _
  $region6: #{tpu_custom_call.1} parent=0 // loop_footer
    %s12 = sadd.s32 1, %s8
  $region7: #{tpu_custom_call.1} parent=0 // loop_footer_branch
    %7 = sbr.rel target = $region3
  $region8: #{tpu_custom_call.1} parent=0 // loop_exit
    _

</llo_original>
